<compile_context>
chip_gen: v5e
topology: v5e:2x2
jax: 0.10.0
libtpu: 0.0.40
codegen_flags: <defaults>
</compile_context>

<pallas_src>
import functools

import jax
import jax.numpy as jnp
from jax.experimental import pallas as pl
from jax.experimental.pallas import tpu as pltpu

# Tile-size ceilings (clamped to exact divisors of the padded problem dims).
# Max f32 working set with double buffering:
#   2*(tm*tk + tk*tn + tm*tn)*4 + tm*tn*4  ~= 18 MiB at (512, 1024, 1024)
# -> safe on v5e/v6e (128 MiB VMEM) and v7x (64 MiB VMEM).
_TM_MAX = 512
_TN_MAX = 1024
_TK_MAX = 1024
_VMEM_LIMIT_BYTES = 48 * 1024 * 1024


def _round_up(x, m):
    return ((x + m - 1) // m) * m


def _sublane_rows(dtype):
    # Packed sublane tile height: 8 rows for 4-byte dtypes, 16 for bf16, 32 for 1-byte.
    return max(8, 32 // jnp.dtype(dtype).itemsize)


def _pick_tile(padded_dim, ceiling):
    """Largest 128-multiple tile <= ceiling that exactly divides padded_dim.

    padded_dim must be a multiple of 128. Exact division avoids re-padding the
    (pre-prepared) weight and keeps every DMA tile lane-dense and unmasked.
    """
    q = padded_dim // 128
    best = 1
    for d in range(1, q + 1):
        if q % d == 0 and d * 128 <= ceiling:
            best = d
    return best * 128


def prepare_expert_params(weight, bias):
    """One-time parameter prep (call at init, NOT per forward).

    weight: [out, in] (PyTorch nn.Linear layout)
    bias:   [out]
    Returns (w_kn, b_row):
      w_kn:  [K_pad, N_pad]  -- transposed to MXU-native [K, N], zero-padded
      b_row: [1, N_pad]
    """
    out_size, in_size = weight.shape
    n_pad = _round_up(out_size, 128)
    k_pad = _round_up(in_size, 128)
    w_kn = jnp.pad(weight.T, ((0, k_pad - in_size), (0, n_pad - out_size)))
    b_row = jnp.pad(bias, (0, n_pad - out_size)).reshape(1, n_pad)
    return w_kn, b_row


# --------------------------------------------------------------------------- #
# Kernels: x (tm, tk) @ w (tk, tn) -> o (tm, tn), f32 accumulation on the MXU. #
# --------------------------------------------------------------------------- #

def _linear_kernel_single_k(x_ref, w_ref, b_ref, o_ref):
    """grid_k == 1: single fused matmul + bias, no accumulator needed."""
    o_ref[...] = (
        jnp.dot(x_ref[...], w_ref[...], preferred_element_type=jnp.float32)
        + b_ref[...]
    ).astype(o_ref.dtype)


def _linear_kernel_inplace_f32(x_ref, w_ref, b_ref, o_ref):
    """grid_k > 1, f32 output: accumulate directly into the resident output tile."""
    k = pl.program_id(2)

    @pl.when(k == 0)
    def _():
        o_ref[...] = jnp.zeros_like(o_ref)

    o_ref[...] += jnp.dot(x_ref[...], w_ref[...], preferred_element_type=jnp.float32)

    @pl.when(k == pl.num_programs(2) - 1)
    def _():
        o_ref[...] += b_ref[...]


def _linear_kernel_scratch(x_ref, w_ref, b_ref, o_ref, acc_ref):
    """grid_k > 1, narrow output dtype: f32 VMEM scratch accumulator."""
    k = pl.program_id(2)

    @pl.when(k == 0)
    def _():
        acc_ref[...] = jnp.zeros_like(acc_ref)

    acc_ref[...] += jnp.dot(x_ref[...], w_ref[...], preferred_element_type=jnp.float32)

    @pl.when(k == pl.num_programs(2) - 1)
    def _():
        o_ref[...] = (acc_ref[...] + b_ref[...]).astype(o_ref.dtype)


@functools.partial(jax.jit, static_argnames=("out_size",))
def expert_layer_forward(x, w_kn, b_row, *, out_size):
    """y = x @ W^T + b  (matches torch.nn.Linear.forward).

    x:     [..., input_size]
    w_kn:  [K_pad, N_pad]   prepared weight (see prepare_expert_params)
    b_row: [1, N_pad]       prepared bias
    """
    k_pad, n_pad = w_kn.shape
    lead = x.shape[:-1]
    in_size = x.shape[-1]
    m = 1
    for d in lead:
        m *= d
    x2d = x.reshape(m, in_size)

    # Tile selection (all Python ints under jit: shapes are static).
    tk = _pick_tile(k_pad, _TK_MAX)
    tn = _pick_tile(n_pad, _TN_MAX)

    sub = _sublane_rows(x.dtype)
    m_pad = _round_up(max(m, 1), sub)
    tm = min(_TM_MAX, m_pad)
    m_pad = _round_up(m_pad, tm)

    grid_i = m_pad // tm
    grid_j = n_pad // tn
    # v7x has 2 TensorCores: if both parallel axes collapsed to a single block,
    # halve tn so grid_j >= 2 and the second core is not idle.
    if grid_i == 1 and grid_j == 1 and tn % 256 == 0:
        tn //= 2
        grid_j = n_pad // tn
    grid_k = k_pad // tk
    grid = (grid_i, grid_j, grid_k)

    # Only the activation is padded per call (weight/bias were padded once at init).
    x_p = jnp.pad(x2d, ((0, m_pad - m), (0, k_pad - in_size)))

    # TODO(synk): if numerics allow, cast x / store w_kn in bf16 (keep f32
    # accumulation) for ~2x on all generations; fp8 weights on v7x.

    x_spec = pl.BlockSpec((tm, tk), lambda i, j, k: (i, k))
    w_spec = pl.BlockSpec((tk, tn), lambda i, j, k: (k, j))   # MXU-native [K, N]
    b_spec = pl.BlockSpec((1, tn), lambda i, j, k: (0, j))
    o_spec = pl.BlockSpec((tm, tn), lambda i, j, k: (i, j))
    # TODO(synk): if a profile shows exposed DMA, sweep
    # pipeline_mode=pl.Buffered(3) on the weight BlockSpec.

    if grid_k == 1:
        kernel = _linear_kernel_single_k
        scratch_shapes = []
    elif x.dtype == jnp.float32:
        kernel = _linear_kernel_inplace_f32
        scratch_shapes = []
    else:
        kernel = _linear_kernel_scratch
        scratch_shapes = [pltpu.VMEM((tm, tn), jnp.float32)]

    itemsize = jnp.dtype(x.dtype).itemsize
    bytes_accessed = (
        m_pad * k_pad * itemsize * grid_j                     # x re-streamed per j
        + k_pad * n_pad * w_kn.dtype.itemsize * grid_i        # w re-streamed per i
        + n_pad * b_row.dtype.itemsize * grid_i
        + m_pad * n_pad * itemsize                            # output written once
    )

    y2d = pl.pallas_call(
        kernel,
        out_shape=jax.ShapeDtypeStruct((m_pad, n_pad), x.dtype),
        grid_spec=pltpu.PrefetchScalarGridSpec(
            num_scalar_prefetch=0,
            grid=grid,
            in_specs=[x_spec, w_spec, b_spec],
            out_specs=o_spec,
            scratch_shapes=scratch_shapes,
        ),
        compiler_params=pltpu.CompilerParams(
            dimension_semantics=("parallel", "parallel", "arbitrary"),
            vmem_limit_bytes=_VMEM_LIMIT_BYTES,
        ),
        cost_estimate=pl.CostEstimate(
            flops=2 * m_pad * n_pad * k_pad,
            transcendentals=0,
            bytes_accessed=bytes_accessed,
        ),
    )(x_p, w_kn, b_row)

    return y2d[:m, :out_size].reshape(*lead, out_size)


def init_expert_layer_params(key, input_size, output_size, dtype=jnp.float32):
    # Deterministic init mirroring nn.Linear's default U(-1/sqrt(in), 1/sqrt(in)).
    kw, kb = jax.random.split(key)
    bound = 1.0 / (input_size ** 0.5)
    weight = jax.random.uniform(kw, (output_size, input_size), dtype,
                                minval=-bound, maxval=bound)
    bias = jax.random.uniform(kb, (output_size,), dtype,
                              minval=-bound, maxval=bound)
    return weight, bias


if __name__ == "__main__":
    key = jax.random.PRNGKey(0)
    k_x, k_p = jax.random.split(key)

    batch, seq, input_size, output_size = 2, 8, 32, 16
    x = jax.random.normal(k_x, (batch, seq, input_size), dtype=jnp.float32)
    weight, bias = init_expert_layer_params(k_p, input_size, output_size)

    # One-time param prep (transpose to [K, N] + pad) — hoisted out of the forward path.
    w_kn, b_row = prepare_expert_params(weight, bias)

    y = expert_layer_forward(x, w_kn, b_row, out_size=output_size)
    jax.block_until_ready(y)

    # Sanity check against plain-JAX reference (PyTorch nn.Linear semantics).
    y_ref = x @ weight.T + bias
    assert y.shape == (batch, seq, output_size)
    assert jnp.allclose(y, y_ref, atol=1e-5, rtol=1e-5)

    # TODO(synk): for real MoE deployment with many experts and few tokens per
    # expert, fold an expert/group axis into the grid (PrefetchScalarGridSpec with
    # group offsets) instead of one pallas_call per expert.

    print("KERNEL_OK")
</pallas_src>

<mosaic_0001>
module attributes {stable_mosaic.version = 11 : i64} {
  func.func @_linear_kernel_single_k(%arg0: i32, %arg1: i32, %arg2: i32, %arg3: memref<16x128xf32, #tpu.memory_space<vmem>>, %arg4: memref<128x128xf32, #tpu.memory_space<vmem>>, %arg5: memref<1x128xf32, #tpu.memory_space<vmem>>, %arg6: memref<16x128xf32, #tpu.memory_space<vmem>>) attributes {dimension_semantics = [#tpu.dimension_semantics<parallel>, #tpu.dimension_semantics<parallel>, #tpu.dimension_semantics<arbitrary>], iteration_bounds = array<i64: 1, 1, 1>, scalar_prefetch = 0 : i64, scratch_operands = 0 : i64, tpu.core_type = #tpu.core_type<tc>, window_params = [{transform_indices = @transform_0, window_bounds = array<i64: 16, 128>}, {transform_indices = @transform_1, window_bounds = array<i64: 128, 128>}, {transform_indices = @transform_2, window_bounds = array<i64: 1, 128>}, {transform_indices = @transform_3, window_bounds = array<i64: 16, 128>}]} {
    %c0 = arith.constant 0 : index
    %c0_0 = arith.constant 0 : index
    %0 = vector.load %arg3[%c0, %c0_0] : memref<16x128xf32, #tpu.memory_space<vmem>>, vector<16x128xf32>
    %c0_1 = arith.constant 0 : index
    %c0_2 = arith.constant 0 : index
    %1 = vector.load %arg4[%c0_1, %c0_2] : memref<128x128xf32, #tpu.memory_space<vmem>>, vector<128x128xf32>
    %cst = arith.constant dense<0.000000e+00> : vector<16x128xf32>
    %2 = tpu.matmul %0, %1, %cst {dimension_numbers = #tpu.dot_dimension_numbers<[1], [0], [0], [1], [0, 0, 1, 1], [], []>} : vector<16x128xf32>, vector<128x128xf32>, vector<16x128xf32> -> vector<16x128xf32>
    %c0_3 = arith.constant 0 : index
    %c0_4 = arith.constant 0 : index
    %3 = vector.load %arg5[%c0_3, %c0_4] : memref<1x128xf32, #tpu.memory_space<vmem>>, vector<1x128xf32>
    %4 = vector.broadcast %3 : vector<1x128xf32> to vector<16x128xf32>
    %5 = arith.addf %2, %4 : vector<16x128xf32>
    %c0_5 = arith.constant 0 : index
    %c0_6 = arith.constant 0 : index
    %6 = vector.load %arg6[%c0_5, %c0_6] : memref<16x128xf32, #tpu.memory_space<vmem>>, vector<16x128xf32>
    tpu.vector_store %arg6[%c0_5, %c0_6], %5 {strides = array<i32>} : memref<16x128xf32, #tpu.memory_space<vmem>>, vector<16x128xf32>,
    return
  }
  func.func @transform_0(%arg0: i32, %arg1: i32, %arg2: i32) -> (i32, i32) {
    %c0_i32 = arith.constant 0 : i32
    return %arg0, %arg2 : i32, i32
  }
  func.func @transform_1(%arg0: i32, %arg1: i32, %arg2: i32) -> (i32, i32) {
    %c0_i32 = arith.constant 0 : i32
    return %arg2, %arg1 : i32, i32
  }
  func.func @transform_2(%arg0: i32, %arg1: i32, %arg2: i32) -> (i32, i32) {
    %c0_i32 = arith.constant 0 : i32
    %c0_i32_0 = arith.constant 0 : i32
    return %c0_i32, %arg1 : i32, i32
  }
  func.func @transform_3(%arg0: i32, %arg1: i32, %arg2: i32) -> (i32, i32) {
    %c0_i32 = arith.constant 0 : i32
    return %arg0, %arg1 : i32, i32
  }
}

</mosaic_0001>

<llo_original>
// kernel: expert_layer_forward.1
$region0: #{expert_layer_forward.1}
  #allocation0 [shape = 'u32[]', space=smem, size = 0x4, offset = 0x4, fixed_abs, tag = 'smem constant byte address 0x4 - core index']
  #allocation1 [shape = 'u32[72,128]{1,0:T(1,128)}', space=vmem, size = 0x9000, scoped, tag = 'internal scratch']
  %s0 = inlined_call_operand.vmem [shape: f32[16,128], index: 0, kind: input, shape index: {}]
  %s1 = inlined_call_operand.hbm [shape: f32[128,128], index: 1, kind: input, shape index: {}]
  %s2 = inlined_call_operand.vmem [shape: f32[1,128], index: 2, kind: input, shape index: {}]
  %s3 = inlined_call_operand.vmem [shape: f32[16,128], index: 3, kind: output, shape index: {}]
  %s4 = sld [smem:[#allocation0]]
  $region26: #{expert_layer_forward.1} parent=0
    _
  %s6 = ssub.s32 1, %s4
  %s7 = scalar_select 0, %s6, %s4
  $region1: #{expert_layer_forward.1} parent=0
    #allocation2 [shape = 'u8[65536]{0}', space=vmem, size = 0x10000, scoped, tag = 'input window, operand 1, single buffered']
    #allocation3 [shape = 's32[1]{0}', space=sflag, size = 0x4, scoped, tag = 'scoped memory for expert_layer_forward.1']
    %8 = vsyncpa [#allocation3], 0
    // Predicated region
    $region2: #{expert_layer_forward.1} parent=1 // pred_check
      _
    $region3: #{expert_layer_forward.1} parent=1 // pred_check_branch
      %10 = sbr.rel (0) target = $region5
    $region4: #{expert_layer_forward.1} parent=1 // pred_region
      _
    $region5: #{expert_layer_forward.1} parent=1 // pred_fallthru
      _
    // Predicated region
    $region6: #{expert_layer_forward.1} parent=1 // pred_check
      _
    $region7: #{expert_layer_forward.1} parent=1 // pred_check_branch
      %12 = sbr.rel (0) target = $region9
    $region8: #{expert_layer_forward.1} parent=1 // pred_region
      %14 = vsyncadd [#allocation3], 0
      %s15 = sshll.u32 %s1, 4
      %s16 = int_to_ptr.hbm [resolvable:$true] %s15
      %s17 = sshll.u32 [#allocation2], 4
      %s18 = int_to_ptr.vmem [resolvable:$true] %s17
      %23 = dma.hbm_to_vmem [thread:$0]  %s16, 2048, %s18, [#allocation3], 128, 128, 8
    $region9: #{expert_layer_forward.1} parent=1 // pred_fallthru
      _
    // Predicated region
    $region10: #{expert_layer_forward.1} parent=1 // pred_check
      _
    $region11: #{expert_layer_forward.1} parent=1 // pred_check_branch
      %25 = sbr.rel (0) target = $region13
    $region12: #{expert_layer_forward.1} parent=1 // pred_region
      _
    $region13: #{expert_layer_forward.1} parent=1 // pred_fallthru
      _
    // Predicated region
    $region14: #{expert_layer_forward.1} parent=1 // pred_check
      _
    $region15: #{expert_layer_forward.1} parent=1 // pred_check_branch
      %27 = sbr.rel (0) target = $region17
    $region16: #{expert_layer_forward.1} parent=1 // pred_region
      %29 = dma.done [#allocation3], 2048
    $region17: #{expert_layer_forward.1} parent=1 // pred_fallthru
      _
    %v30 = vld [vmem:[%s0] sm:$0xff]
    %v31 = vld [vmem:[%s0 + $0x8] sm:$0xff]
    %v32 = vld [vmem:[#allocation2] sm:$0xff]
    %v33 = vld [vmem:[#allocation2 + $0x8] sm:$0xff]
    %v34 = vld [vmem:[#allocation2 + $0x10] sm:$0xff]
    %v35 = vld [vmem:[#allocation2 + $0x18] sm:$0xff]
    %v36 = vld [vmem:[#allocation2 + $0x20] sm:$0xff]
    %v37 = vld [vmem:[#allocation2 + $0x28] sm:$0xff]
    %v38 = vld [vmem:[#allocation2 + $0x30] sm:$0xff]
    %v39 = vld [vmem:[#allocation2 + $0x38] sm:$0xff]
    %v40 = vld [vmem:[#allocation2 + $0x40] sm:$0xff]
    %v41 = vld [vmem:[#allocation2 + $0x48] sm:$0xff]
    %v42 = vld [vmem:[#allocation2 + $0x50] sm:$0xff]
    %v43 = vld [vmem:[#allocation2 + $0x58] sm:$0xff]
    %v44 = vld [vmem:[#allocation2 + $0x60] sm:$0xff]
    %v45 = vld [vmem:[#allocation2 + $0x68] sm:$0xff]
    %v46 = vld [vmem:[#allocation2 + $0x70] sm:$0xff]
    %v47 = vld [vmem:[#allocation2 + $0x78] sm:$0xff]
    %v48 = vld [vmem:[%s2] sm:$0x1]
    %v50 = vperm.slane %v48, 0
    %52 = vmatpush.msra.mxu0 %v47
    %53 = vmatpush.msra.mxu0 %v46
    %54 = vmatpush.msra.mxu0 %v45
    %55 = vmatpush.msra.mxu0 %v44
    %56 = vmatpush.msra.mxu0 %v43
    %57 = vmatpush.msra.mxu0 %v42
    %58 = vmatpush.msra.mxu0 %v41
    %59 = vmatpush.msra.mxu0 %v40
    %60 = vmatpush.msra.mxu0 %v39
    %61 = vmatpush.msra.mxu0 %v38
    %62 = vmatpush.msra.mxu0 %v37
    %63 = vmatpush.msra.mxu0 %v36
    %64 = vmatpush.msra.mxu0 %v35
    %65 = vmatpush.msra.mxu0 %v34
    %66 = vmatpush.msra.mxu0 %v33
    %67 = vmatpush.msra.mxu0 %v32
    %68 = vmatmul.f32.gmra.mxu0 %v30
    %v69 = vpop.f32.mrf.mxu0
    %v70 = vadd.f32 %v50, %v69
    %71 = vmatmul.f32.gmra.mxu0 %v31
    %v72 = vpop.f32.mrf.mxu0
    %v73 = vadd.f32 %v50, %v72
    %74 = vdwg.mxu0
    %75 = vst [vmem:[%s3] sm:$0xff] %v70
    %76 = vst [vmem:[%s3 + $0x8] sm:$0xff] %v73
    // Predicated region
    $region18: #{expert_layer_forward.1} parent=1 // pred_check
      _
    $region19: #{expert_layer_forward.1} parent=1 // pred_check_branch
      %78 = sbr.rel (0) target = $region21
    $region20: #{expert_layer_forward.1} parent=1 // pred_region
      _
    $region21: #{expert_layer_forward.1} parent=1 // pred_fallthru
      _
    // Predicated region
    $region22: #{expert_layer_forward.1} parent=1 // pred_check
      _
    $region23: #{expert_layer_forward.1} parent=1 // pred_check_branch
      %80 = sbr.rel (0) target = $region25
    $region24: #{expert_layer_forward.1} parent=1 // pred_region
      _
    $region25: #{expert_layer_forward.1} parent=1 // pred_fallthru
      _
    %81 = vsyncpa [#allocation3], 1

</llo_original>
